<compile_context>
chip_gen: v7x
topology: tpu7x:2x2x1
jax: 0.10.0
libtpu: 0.0.40
codegen_flags: <defaults>
</compile_context>

<pallas_src>
import functools

import jax
import jax.numpy as jnp
from jax.experimental import pallas as pl
from jax.experimental.pallas import tpu as pltpu

_SUBLANE = 8  # batch tile must be a multiple of 8 sublanes


def _cdiv(a, b):
    return -(-a // b)


def _round_up(x, m):
    return _cdiv(x, m) * m


def _activation(name):
    if name == "relu":
        return lambda h: jnp.maximum(h, 0.0)
    if name == "tanh":
        return jnp.tanh
    if name == "sigmoid":
        return jax.nn.sigmoid
    raise ValueError(f"Unsupported activation function: {name}")


# ----------------------------------------------------------------------------
# Kernel: one batch block through the whole MLP.
#   refs = (w1, b1, w2, b2, ..., wL, bL, out)
# Activation after every layer except the last (AEVModel has no activation on
# the bottleneck output).  Dots use MXU-friendly operand dtype (bf16) with f32
# accumulation; bias-add / activation are f32.
# ----------------------------------------------------------------------------
def _aev_mlp_kernel(activ, n_layers, x_ref, *refs):
    o_ref = refs[-1]
    wb = refs[:-1]
    act = _activation(activ)

    h = x_ref[...].astype(jnp.float32)
    for i in range(n_layers):
        w = wb[2 * i][...]          # (in_d, out_d), matmul dtype (bf16)
        b = wb[2 * i + 1][...]      # (1, out_d), f32
        h = jnp.dot(h.astype(w.dtype), w, preferred_element_type=jnp.float32)
        h = h + b
        if i < n_layers - 1:
            h = act(h)
    o_ref[...] = h.astype(o_ref.dtype)


# ----------------------------------------------------------------------------
# One-time parameter preparation (hoisted out of the hot path).
# ----------------------------------------------------------------------------
def prepare_params(params, matmul_dtype=jnp.bfloat16):
    """params: list of (w, b), w: (in_features, out_features), b: (out_features,).
    Returns a flat list [w1, b1, w2, b2, ...] with weights in matmul_dtype and
    biases as (1, out_features) f32."""
    flat = []
    for (w, b) in params:
        flat.append(jnp.asarray(w, matmul_dtype))
        flat.append(jnp.asarray(b, jnp.float32).reshape(1, -1))
    return flat


def _pick_batch_tiling(B, block_b):
    """Choose (n_blocks, bb, B_pad) so that padding waste is small and there
    are >= 2 grid steps whenever B allows (two TensorCores on v7x)."""
    n_blocks = max(1, _cdiv(B, block_b))
    if n_blocks == 1 and B >= 2 * _SUBLANE:
        n_blocks = 2
    bb = _round_up(_cdiv(B, n_blocks), _SUBLANE)
    B_pad = n_blocks * bb
    return n_blocks, bb, B_pad


# ----------------------------------------------------------------------------
# Forward wrapper.
# ----------------------------------------------------------------------------
def aev_forward(x, prepared_params, activ="relu", block_b=1024):
    """x: (B, event_dim); prepared_params: output of prepare_params()."""
    B, event_dim = x.shape
    n_layers = len(prepared_params) // 2
    out_dim = int(prepared_params[-1].shape[-1])
    dims = [event_dim] + [int(prepared_params[2 * i].shape[1]) for i in range(n_layers)]

    n_blocks, bb, B_pad = _pick_batch_tiling(B, block_b)

    x32 = jnp.asarray(x, jnp.float32)
    if B_pad != B:
        x32 = jnp.pad(x32, ((0, B_pad - B), (0, 0)))  # batch pad only

    # Shape-derived VMEM budget: resident weights/biases + double-buffered
    # x/out batch blocks + a few copies of the widest intermediate.
    weight_bytes = sum(int(a.size) * a.dtype.itemsize for a in prepared_params)
    stream_bytes = 2 * bb * (event_dim + out_dim) * 4
    inter_bytes = 6 * bb * max(dims) * 4
    needed = weight_bytes + stream_bytes + inter_bytes
    vmem_limit = int(min(max(2 * needed, 32 * 2**20), 64 * 2**20))

    # x / out: tiled along batch (last dim == full array dim => legal, no pad).
    # Weights / biases: whole array resident in VMEM (fetched once, single copy).
    in_specs = [pl.BlockSpec((bb, event_dim), lambda i: (i, 0))]
    in_specs += [pl.BlockSpec(memory_space=pltpu.MemorySpace.VMEM)
                 for _ in prepared_params]
    out_specs = pl.BlockSpec((bb, out_dim), lambda i: (i, 0))

    kernel = functools.partial(_aev_mlp_kernel, activ, n_layers)
    out = pl.pallas_call(
        kernel,
        out_shape=jax.ShapeDtypeStruct((B_pad, out_dim), jnp.float32),
        grid=(n_blocks,),
        in_specs=in_specs,
        out_specs=out_specs,
        compiler_params=pltpu.CompilerParams(
            dimension_semantics=("parallel",),
            vmem_limit_bytes=vmem_limit,
        ),
    )(x32, *prepared_params)

    return out[:B] if B_pad != B else out


# ----------------------------------------------------------------------------
# Deterministic parameter init (PyTorch nn.Linear style: U(-1/sqrt(fan_in), .))
# ----------------------------------------------------------------------------
def init_params(key, event_dim, bottleneck_dim, hidden_node_counts):
    dims = [event_dim] + list(hidden_node_counts) + [bottleneck_dim]
    params = []
    for i in range(len(dims) - 1):
        fan_in, fan_out = dims[i], dims[i + 1]
        key, kw, kb = jax.random.split(key, 3)
        bound = 1.0 / (fan_in ** 0.5)
        w = jax.random.uniform(kw, (fan_in, fan_out), jnp.float32, -bound, bound)
        b = jax.random.uniform(kb, (fan_out,), jnp.float32, -bound, bound)
        params.append((w, b))
    return params


def reference_forward(x, params, activ="relu", matmul_dtype=jnp.float32):
    """Pure-JAX reference.  matmul_dtype lets us match the kernel's bf16
    operand casts exactly (accumulation / bias / activation stay f32)."""
    act = _activation(activ)
    h = jnp.asarray(x, jnp.float32)
    for i, (w, b) in enumerate(params):
        h = jnp.dot(h.astype(matmul_dtype), jnp.asarray(w, matmul_dtype),
                    preferred_element_type=jnp.float32)
        h = h + jnp.asarray(b, jnp.float32)
        if i < len(params) - 1:
            h = act(h)
    return h


if __name__ == "__main__":
    # Small shapes consistent with the module.
    event_dim = 32
    bottleneck_dim = 24
    hidden_node_counts = (32, 32)
    activ = "tanh"
    B = 16  # splits into 2 batch tiles -> exercises the multi-step grid path

    key = jax.random.PRNGKey(0)
    key, kx = jax.random.split(key)
    x = jax.random.normal(kx, (B, event_dim), jnp.float32)
    params = init_params(key, event_dim, bottleneck_dim, hidden_node_counts)

    prepared = prepare_params(params, matmul_dtype=jnp.bfloat16)
    out = aev_forward(x, prepared, activ)
    jax.block_until_ready(out)
    assert out.shape == (B, bottleneck_dim), out.shape

    # 1) Match a reference that uses the same bf16 matmul operands (tight).
    ref_bf16 = reference_forward(x, params, activ, matmul_dtype=jnp.bfloat16)
    assert jnp.allclose(out, ref_bf16, atol=1e-4, rtol=1e-4)

    # 2) Sanity vs. full-f32 reference (bf16-operand approximation error).
    ref_f32 = reference_forward(x, params, activ, matmul_dtype=jnp.float32)
    assert jnp.allclose(out, ref_f32, atol=3e-2, rtol=3e-2)

    print("KERNEL_OK")
</pallas_src>

<mosaic_0001>
module attributes {stable_mosaic.version = 11 : i64} {
  func.func @_aev_mlp_kernel(%arg0: i32, %arg1: memref<8x32xf32, #tpu.memory_space<vmem>>, %arg2: memref<32x32xbf16, #tpu.memory_space<vmem>>, %arg3: memref<1x32xf32, #tpu.memory_space<vmem>>, %arg4: memref<32x32xbf16, #tpu.memory_space<vmem>>, %arg5: memref<1x32xf32, #tpu.memory_space<vmem>>, %arg6: memref<32x24xbf16, #tpu.memory_space<vmem>>, %arg7: memref<1x24xf32, #tpu.memory_space<vmem>>, %arg8: memref<8x24xf32, #tpu.memory_space<vmem>>) attributes {dimension_semantics = [#tpu.dimension_semantics<parallel>], iteration_bounds = array<i64: 2>, scalar_prefetch = 0 : i64, scratch_operands = 0 : i64, tpu.core_type = #tpu.core_type<tc>, window_params = [{transform_indices = @transform_0, window_bounds = array<i64: 8, 32>}, {pipeline_mode = #tpu.pipeline_mode<synchronous>, transform_indices = @transform_1, window_bounds = array<i64: 32, 32>}, {pipeline_mode = #tpu.pipeline_mode<synchronous>, transform_indices = @transform_2, window_bounds = array<i64: 1, 32>}, {pipeline_mode = #tpu.pipeline_mode<synchronous>, transform_indices = @transform_3, window_bounds = array<i64: 32, 32>}, {pipeline_mode = #tpu.pipeline_mode<synchronous>, transform_indices = @transform_4, window_bounds = array<i64: 1, 32>}, {pipeline_mode = #tpu.pipeline_mode<synchronous>, transform_indices = @transform_5, window_bounds = array<i64: 32, 24>}, {pipeline_mode = #tpu.pipeline_mode<synchronous>, transform_indices = @transform_6, window_bounds = array<i64: 1, 24>}, {transform_indices = @transform_7, window_bounds = array<i64: 8, 24>}]} {
    %c0 = arith.constant 0 : index
    %c0_0 = arith.constant 0 : index
    %0 = vector.load %arg1[%c0, %c0_0] : memref<8x32xf32, #tpu.memory_space<vmem>>, vector<8x32xf32>
    %c0_1 = arith.constant 0 : index
    %c0_2 = arith.constant 0 : index
    %1 = vector.load %arg2[%c0_1, %c0_2] : memref<32x32xbf16, #tpu.memory_space<vmem>>, vector<32x32xbf16>
    %c0_3 = arith.constant 0 : index
    %c0_4 = arith.constant 0 : index
    %2 = vector.load %arg3[%c0_3, %c0_4] : memref<1x32xf32, #tpu.memory_space<vmem>>, vector<1x32xf32>
    %3 = arith.truncf %0 : vector<8x32xf32> to vector<8x32xbf16>
    %cst = arith.constant dense<0.000000e+00> : vector<8x32xf32>
    %4 = tpu.matmul %3, %1, %cst {dimension_numbers = #tpu.dot_dimension_numbers<[1], [0], [0], [1], [0, 0, 1, 1], [], []>} : vector<8x32xbf16>, vector<32x32xbf16>, vector<8x32xf32> -> vector<8x32xf32>
    %5 = vector.broadcast %2 : vector<1x32xf32> to vector<8x32xf32>
    %6 = arith.addf %4, %5 : vector<8x32xf32>
    %7 = math.tanh %6 : vector<8x32xf32>
    %c0_5 = arith.constant 0 : index
    %c0_6 = arith.constant 0 : index
    %8 = vector.load %arg4[%c0_5, %c0_6] : memref<32x32xbf16, #tpu.memory_space<vmem>>, vector<32x32xbf16>
    %c0_7 = arith.constant 0 : index
    %c0_8 = arith.constant 0 : index
    %9 = vector.load %arg5[%c0_7, %c0_8] : memref<1x32xf32, #tpu.memory_space<vmem>>, vector<1x32xf32>
    %10 = arith.truncf %7 : vector<8x32xf32> to vector<8x32xbf16>
    %cst_9 = arith.constant dense<0.000000e+00> : vector<8x32xf32>
    %11 = tpu.matmul %10, %8, %cst_9 {dimension_numbers = #tpu.dot_dimension_numbers<[1], [0], [0], [1], [0, 0, 1, 1], [], []>} : vector<8x32xbf16>, vector<32x32xbf16>, vector<8x32xf32> -> vector<8x32xf32>
    %12 = vector.broadcast %9 : vector<1x32xf32> to vector<8x32xf32>
    %13 = arith.addf %11, %12 : vector<8x32xf32>
    %14 = math.tanh %13 : vector<8x32xf32>
    %c0_10 = arith.constant 0 : index
    %c0_11 = arith.constant 0 : index
    %15 = vector.load %arg6[%c0_10, %c0_11] : memref<32x24xbf16, #tpu.memory_space<vmem>>, vector<32x24xbf16>
    %c0_12 = arith.constant 0 : index
    %c0_13 = arith.constant 0 : index
    %16 = vector.load %arg7[%c0_12, %c0_13] : memref<1x24xf32, #tpu.memory_space<vmem>>, vector<1x24xf32>
    %17 = arith.truncf %14 : vector<8x32xf32> to vector<8x32xbf16>
    %cst_14 = arith.constant dense<0.000000e+00> : vector<8x24xf32>
    %18 = tpu.matmul %17, %15, %cst_14 {dimension_numbers = #tpu.dot_dimension_numbers<[1], [0], [0], [1], [0, 0, 1, 1], [], []>} : vector<8x32xbf16>, vector<32x24xbf16>, vector<8x24xf32> -> vector<8x24xf32>
    %19 = vector.broadcast %16 : vector<1x24xf32> to vector<8x24xf32>
    %20 = arith.addf %18, %19 : vector<8x24xf32>
    %c0_15 = arith.constant 0 : index
    %c0_16 = arith.constant 0 : index
    %21 = vector.load %arg8[%c0_15, %c0_16] : memref<8x24xf32, #tpu.memory_space<vmem>>, vector<8x24xf32>
    tpu.vector_store %arg8[%c0_15, %c0_16], %20 {strides = array<i32>} : memref<8x24xf32, #tpu.memory_space<vmem>>, vector<8x24xf32>,
    return
  }
  func.func @transform_0(%arg0: i32) -> (i32, i32) {
    %c0_i32 = arith.constant 0 : i32
    %c0_i32_0 = arith.constant 0 : i32
    return %arg0, %c0_i32 : i32, i32
  }
  func.func @transform_1(%arg0: i32) -> (i32, i32) {
    %c0_i32 = arith.constant 0 : i32
    %c0_i32_0 = arith.constant 0 : i32
    %c0_i32_1 = arith.constant 0 : i32
    return %c0_i32, %c0_i32_0 : i32, i32
  }
  func.func @transform_2(%arg0: i32) -> (i32, i32) {
    %c0_i32 = arith.constant 0 : i32
    %c0_i32_0 = arith.constant 0 : i32
    %c0_i32_1 = arith.constant 0 : i32
    return %c0_i32, %c0_i32_0 : i32, i32
  }
  func.func @transform_3(%arg0: i32) -> (i32, i32) {
    %c0_i32 = arith.constant 0 : i32
    %c0_i32_0 = arith.constant 0 : i32
    %c0_i32_1 = arith.constant 0 : i32
    return %c0_i32, %c0_i32_0 : i32, i32
  }
  func.func @transform_4(%arg0: i32) -> (i32, i32) {
    %c0_i32 = arith.constant 0 : i32
    %c0_i32_0 = arith.constant 0 : i32
    %c0_i32_1 = arith.constant 0 : i32
    return %c0_i32, %c0_i32_0 : i32, i32
  }
  func.func @transform_5(%arg0: i32) -> (i32, i32) {
    %c0_i32 = arith.constant 0 : i32
    %c0_i32_0 = arith.constant 0 : i32
    %c0_i32_1 = arith.constant 0 : i32
    return %c0_i32, %c0_i32_0 : i32, i32
  }
  func.func @transform_6(%arg0: i32) -> (i32, i32) {
    %c0_i32 = arith.constant 0 : i32
    %c0_i32_0 = arith.constant 0 : i32
    %c0_i32_1 = arith.constant 0 : i32
    return %c0_i32, %c0_i32_0 : i32, i32
  }
  func.func @transform_7(%arg0: i32) -> (i32, i32) {
    %c0_i32 = arith.constant 0 : i32
    %c0_i32_0 = arith.constant 0 : i32
    return %arg0, %c0_i32 : i32, i32
  }
}

</mosaic_0001>

<llo_original>
// kernel: tpu_custom_call.1
$region0: #{tpu_custom_call.1}
  #allocation0 [shape = 'u32[]', space=smem, size = 0x4, offset = 0x4, fixed_abs, tag = 'smem constant byte address 0x4 - core index']
  #allocation1 [shape = 'u32[144,128]{1,0:T(1,128)}', space=vmem, size = 0x12000, scoped, tag = 'internal scratch']
  %s0 = inlined_call_operand.vmem [shape: f32[16,32], index: 0, kind: input, shape index: {}]
  %s1 = inlined_call_operand.hbm [shape: bf16[32,32], index: 1, kind: input, shape index: {}]
  %s2 = inlined_call_operand.vmem [shape: f32[1,32], index: 2, kind: input, shape index: {}]
  %s3 = inlined_call_operand.vmem [shape: bf16[32,32], index: 3, kind: input, shape index: {}]
  %s4 = inlined_call_operand.vmem [shape: f32[1,32], index: 4, kind: input, shape index: {}]
  %s5 = inlined_call_operand.vmem [shape: bf16[32,24], index: 5, kind: input, shape index: {}]
  %s6 = inlined_call_operand.vmem [shape: f32[1,24], index: 6, kind: input, shape index: {}]
  %s7 = inlined_call_operand.hbm [shape: f32[16,24], index: 7, kind: output, shape index: {}]
  %s8 = sld [smem:[#allocation0]]
  $region65: #{tpu_custom_call.1} parent=0
    _
  %s10 = ssub.s32 1, %s8
  %s11 = scalar_select 0, %s10, %s8
  $region1: #{tpu_custom_call.1} parent=0
    #allocation2 [shape = 'u8[8192]{0}', space=vmem, size = 0x2000, scoped, tag = 'input window, operand 1, single buffered']
    #allocation3 [shape = 's32[2]{0}', space=sflag, size = 0x8, scoped, tag = 'scoped memory for tpu_custom_call.1']
    #allocation4 [shape = 's32[2]{0}', space=sflag, size = 0x8, scoped, tag = 'scoped memory for tpu_custom_call.1']
    #allocation5 [shape = 'u8[8192]{0}', space=vmem, size = 0x2000, scoped, tag = 'output window, operand 0']
    %12 = vsyncpa [#allocation3], 0
    %13 = vsyncpa [#allocation4], 0
    %s14 = scalar_lea.sflag [#allocation4], 1
    %15 = vsyncpa %s14, 0
    loop: start=0, step=1, limit=4
    $region2: #{tpu_custom_call.1} parent=1 // loop_pre_header
      _
    $region3: #{tpu_custom_call.1} parent=1 // loop_header
      %s17 = sphi 0, %s21
      %p18 = scmp.ge.s32.totalorder %s17, 4
      %s27 = sphi 0, %s29
      %s30 = sphi 0, %s27
      %s31 = sphi 0, %s30
      %s47 = sphi 0, %s31
      %s51 = sphi 0, %s51
      %s53 = sphi 0, %s51
      %s54 = sphi 0, %s53
      %s68 = sphi 0, %s54
      %s72 = sphi 0, %s72
      %s74 = sphi 0, %s72
      %s75 = sphi 0, %s74
      %s89 = sphi 0, %s75
      %s93 = sphi 0, %s93
      %s95 = sphi 0, %s93
      %s96 = sphi 0, %s95
      %s110 = sphi 0, %s96
      %s114 = sphi 0, %s114
      %s116 = sphi 0, %s114
      %s117 = sphi 0, %s116
      %s131 = sphi 0, %s117
      %s135 = sphi 0, %s135
      %s137 = sphi 0, %s135
      %s138 = sphi 0, %s137
      %s152 = sphi 0, %s138
      %s156 = sphi 0, %s156
      %s158 = sphi 0, %s156
      %s159 = sphi 0, %s158
      %s173 = sphi 0, %s159
      %s179 = sphi 0, %s181
      %s182 = sphi 0, %s179
      %s183 = sphi 0, %s182
      %s199 = sphi 0, %s183
    $region4: #{tpu_custom_call.1} parent=1 // loop_header_branch
      %20 = sbr.rel (%p18) target = $region8
    $region5: #{tpu_custom_call.1} parent=1 // loop_body
      %s22 = ssub.s32 %s17, 1
      %s23 = ssub.s32 %s17, 2
      %s24 = sadd.s32 %s17, 1
      %s25 = ssub.s32 %s17, %s24
      %p26 = scmp.eq.s32.totalorder %s25, 0
      %s28 = sadd.s32 %s27, 1
      %s29 = scalar_select %p26, %s27, %s28
      %p32 = pneg %p26
      %p33 = scmp.eq.s32.totalorder %s17, 1
      %p34 = por %p32, %p33
      %p35 = scmp.ne.s32.totalorder %s27, %s30
      %p36 = scmp.eq.s32.totalorder %s17, 0
      %p37 = por %p35, %p36
      %p38 = scmp.ne.s32.totalorder %s27, %s30
      %p39 = scmp.eq.s32.totalorder %s22, 1
      %p40 = por %p38, %p39
      %p41 = scmp.ne.s32.totalorder %s30, %s31
      %p42 = scmp.eq.s32.totalorder %s22, 0
      %p43 = por %p41, %p42
      %p44 = scmp.ne.s32.totalorder %s30, %s31
      %p45 = scmp.eq.s32.totalorder %s23, 1
      %p46 = por %p44, %p45
      %p48 = scmp.ne.s32.totalorder %s31, %s47
      %p49 = scmp.eq.s32.totalorder %s23, 0
      %p50 = por %p48, %p49
      %s52 = sadd.s32 %s51, 1
      %p55 = scmp.eq.s32.totalorder %s17, 1
      %p56 = scmp.ne.s32.totalorder %s51, %s53
      %p57 = scmp.eq.s32.totalorder %s17, 0
      %p58 = por %p56, %p57
      %p59 = scmp.ne.s32.totalorder %s51, %s53
      %p60 = scmp.eq.s32.totalorder %s22, 1
      %p61 = por %p59, %p60
      %p62 = scmp.ne.s32.totalorder %s53, %s54
      %p63 = scmp.eq.s32.totalorder %s22, 0
      %p64 = por %p62, %p63
      %p65 = scmp.ne.s32.totalorder %s53, %s54
      %p66 = scmp.eq.s32.totalorder %s23, 1
      %p67 = por %p65, %p66
      %p69 = scmp.ne.s32.totalorder %s54, %s68
      %p70 = scmp.eq.s32.totalorder %s23, 0
      %p71 = por %p69, %p70
      %s73 = sadd.s32 %s72, 1
      %p76 = scmp.eq.s32.totalorder %s17, 1
      %p77 = scmp.ne.s32.totalorder %s72, %s74
      %p78 = scmp.eq.s32.totalorder %s17, 0
      %p79 = por %p77, %p78
      %p80 = scmp.ne.s32.totalorder %s72, %s74
      %p81 = scmp.eq.s32.totalorder %s22, 1
      %p82 = por %p80, %p81
      %p83 = scmp.ne.s32.totalorder %s74, %s75
      %p84 = scmp.eq.s32.totalorder %s22, 0
      %p85 = por %p83, %p84
      %p86 = scmp.ne.s32.totalorder %s74, %s75
      %p87 = scmp.eq.s32.totalorder %s23, 1
      %p88 = por %p86, %p87
      %p90 = scmp.ne.s32.totalorder %s75, %s89
      %p91 = scmp.eq.s32.totalorder %s23, 0
      %p92 = por %p90, %p91
      %s94 = sadd.s32 %s93, 1
      %p97 = scmp.eq.s32.totalorder %s17, 1
      %p98 = scmp.ne.s32.totalorder %s93, %s95
      %p99 = scmp.eq.s32.totalorder %s17, 0
      %p100 = por %p98, %p99
      %p101 = scmp.ne.s32.totalorder %s93, %s95
      %p102 = scmp.eq.s32.totalorder %s22, 1
      %p103 = por %p101, %p102
      %p104 = scmp.ne.s32.totalorder %s95, %s96
      %p105 = scmp.eq.s32.totalorder %s22, 0
      %p106 = por %p104, %p105
      %p107 = scmp.ne.s32.totalorder %s95, %s96
      %p108 = scmp.eq.s32.totalorder %s23, 1
      %p109 = por %p107, %p108
      %p111 = scmp.ne.s32.totalorder %s96, %s110
      %p112 = scmp.eq.s32.totalorder %s23, 0
      %p113 = por %p111, %p112
      %s115 = sadd.s32 %s114, 1
      %p118 = scmp.eq.s32.totalorder %s17, 1
      %p119 = scmp.ne.s32.totalorder %s114, %s116
      %p120 = scmp.eq.s32.totalorder %s17, 0
      %p121 = por %p119, %p120
      %p122 = scmp.ne.s32.totalorder %s114, %s116
      %p123 = scmp.eq.s32.totalorder %s22, 1
      %p124 = por %p122, %p123
      %p125 = scmp.ne.s32.totalorder %s116, %s117
      %p126 = scmp.eq.s32.totalorder %s22, 0
      %p127 = por %p125, %p126
      %p128 = scmp.ne.s32.totalorder %s116, %s117
      %p129 = scmp.eq.s32.totalorder %s23, 1
      %p130 = por %p128, %p129
      %p132 = scmp.ne.s32.totalorder %s117, %s131
      %p133 = scmp.eq.s32.totalorder %s23, 0
      %p134 = por %p132, %p133
      %s136 = sadd.s32 %s135, 1
      %p139 = scmp.eq.s32.totalorder %s17, 1
      %p140 = scmp.ne.s32.totalorder %s135, %s137
      %p141 = scmp.eq.s32.totalorder %s17, 0
      %p142 = por %p140, %p141
      %p143 = scmp.ne.s32.totalorder %s135, %s137
      %p144 = scmp.eq.s32.totalorder %s22, 1
      %p145 = por %p143, %p144
      %p146 = scmp.ne.s32.totalorder %s137, %s138
      %p147 = scmp.eq.s32.totalorder %s22, 0
      %p148 = por %p146, %p147
      %p149 = scmp.ne.s32.totalorder %s137, %s138
      %p150 = scmp.eq.s32.totalorder %s23, 1
      %p151 = por %p149, %p150
      %p153 = scmp.ne.s32.totalorder %s138, %s152
      %p154 = scmp.eq.s32.totalorder %s23, 0
      %p155 = por %p153, %p154
      %s157 = sadd.s32 %s156, 1
      %p160 = scmp.eq.s32.totalorder %s17, 1
      %p161 = scmp.ne.s32.totalorder %s156, %s158
      %p162 = scmp.eq.s32.totalorder %s17, 0
      %p163 = por %p161, %p162
      %p164 = scmp.ne.s32.totalorder %s156, %s158
      %p165 = scmp.eq.s32.totalorder %s22, 1
      %p166 = por %p164, %p165
      %p167 = scmp.ne.s32.totalorder %s158, %s159
      %p168 = scmp.eq.s32.totalorder %s22, 0
      %p169 = por %p167, %p168
      %p170 = scmp.ne.s32.totalorder %s158, %s159
      %p171 = scmp.eq.s32.totalorder %s23, 1
      %p172 = por %p170, %p171
      %p174 = scmp.ne.s32.totalorder %s159, %s173
      %p175 = scmp.eq.s32.totalorder %s23, 0
      %p176 = por %p174, %p175
      %s177 = ssub.s32 %s17, %s24
      %p178 = scmp.eq.s32.totalorder %s177, 0
      %s180 = sadd.s32 %s179, 1
      %s181 = scalar_select %p178, %s179, %s180
      %p184 = pneg %p178
      %p185 = scmp.eq.s32.totalorder %s17, 1
      %p186 = por %p184, %p185
      %p187 = scmp.ne.s32.totalorder %s179, %s182
      %p188 = scmp.eq.s32.totalorder %s17, 0
      %p189 = por %p187, %p188
      %p190 = scmp.ne.s32.totalorder %s179, %s182
      %p191 = scmp.eq.s32.totalorder %s22, 1
      %p192 = por %p190, %p191
      %p193 = scmp.ne.s32.totalorder %s182, %s183
      %p194 = scmp.eq.s32.totalorder %s22, 0
      %p195 = por %p193, %p194
      %p196 = scmp.ne.s32.totalorder %s182, %s183
      %p197 = scmp.eq.s32.totalorder %s23, 1
      %p198 = por %p196, %p197
      %p200 = scmp.ne.s32.totalorder %s183, %s199
      %p201 = scmp.eq.s32.totalorder %s23, 0
      %p202 = por %p200, %p201
      %p203 = scmp.le.s32.totalorder 1, %s17
      %p204 = scmp.lt.s32.totalorder %s17, 3
      %p205 = pnand %p203, %p204
      %p206 = pneg %p205
      // Predicated region
      $region9: #{tpu_custom_call.1} parent=5 // pred_check
        _
      $region10: #{tpu_custom_call.1} parent=5 // pred_check_branch
        %208 = sbr.rel (%p205) target = $region12
      $region11: #{tpu_custom_call.1} parent=5 // pred_region
        %s209 = ssub.s32 %s17, 1
        // Predicated region
        $region13: #{tpu_custom_call.1} parent=11 // pred_check
          %p210 = pneg %p64
        $region14: #{tpu_custom_call.1} parent=11 // pred_check_branch
          %212 = sbr.rel (%p210) target = $region16
        $region15: #{tpu_custom_call.1} parent=11 // pred_region
          %s214 = ssub.s32 256, 256
          %215 = vsyncadd [#allocation3], %s214
          %s216 = sshll.u32 [#allocation2], 4
          %s217 = int_to_ptr.vmem [resolvable:$true] %s216
          %222 = dma.hbm_to_vmem [thread:$0]  %s1, 256, %s217, [#allocation3], 64, 64, 4
        $region16: #{tpu_custom_call.1} parent=11 // pred_fallthru
          _
        // Predicated region
        $region17: #{tpu_custom_call.1} parent=11 // pred_check
          %p223 = pneg %p85
        $region18: #{tpu_custom_call.1} parent=11 // pred_check_branch
          %225 = sbr.rel (%p223) target = $region20
        $region19: #{tpu_custom_call.1} parent=11 // pred_region
          _
        $region20: #{tpu_custom_call.1} parent=11 // pred_fallthru
          _
        // Predicated region
        $region21: #{tpu_custom_call.1} parent=11 // pred_check
          %p226 = pneg %p106
        $region22: #{tpu_custom_call.1} parent=11 // pred_check_branch
          %228 = sbr.rel (%p226) target = $region24
        $region23: #{tpu_custom_call.1} parent=11 // pred_region
          _
        $region24: #{tpu_custom_call.1} parent=11 // pred_fallthru
          _
        // Predicated region
        $region25: #{tpu_custom_call.1} parent=11 // pred_check
          %p229 = pneg %p127
        $region26: #{tpu_custom_call.1} parent=11 // pred_check_branch
          %231 = sbr.rel (%p229) target = $region28
        $region27: #{tpu_custom_call.1} parent=11 // pred_region
          _
        $region28: #{tpu_custom_call.1} parent=11 // pred_fallthru
          _
        // Predicated region
        $region29: #{tpu_custom_call.1} parent=11 // pred_check
          %p232 = pneg %p148
        $region30: #{tpu_custom_call.1} parent=11 // pred_check_branch
          %234 = sbr.rel (%p232) target = $region32
        $region31: #{tpu_custom_call.1} parent=11 // pred_region
          _
        $region32: #{tpu_custom_call.1} parent=11 // pred_fallthru
          _
        // Predicated region
        $region33: #{tpu_custom_call.1} parent=11 // pred_check
          %p235 = pneg %p169
        $region34: #{tpu_custom_call.1} parent=11 // pred_check_branch
          %237 = sbr.rel (%p235) target = $region36
        $region35: #{tpu_custom_call.1} parent=11 // pred_region
          _
        $region36: #{tpu_custom_call.1} parent=11 // pred_fallthru
          _
      $region12: #{tpu_custom_call.1} parent=5 // pred_fallthru
        _
      %p238 = scmp.lt.s32.totalorder %s17, 2
      // Predicated region
      $region37: #{tpu_custom_call.1} parent=5 // pred_check
        %p239 = pneg %p238
      $region38: #{tpu_custom_call.1} parent=5 // pred_check_branch
        %241 = sbr.rel (%p239) target = $region40
      $region39: #{tpu_custom_call.1} parent=5 // pred_region
        // Predicated region
        $region41: #{tpu_custom_call.1} parent=39 // pred_check
          %p242 = pneg %p37
        $region42: #{tpu_custom_call.1} parent=39 // pred_check_branch
          %244 = sbr.rel (%p242) target = $region44
        $region43: #{tpu_custom_call.1} parent=39 // pred_region
          %p245 = scmp.lt.s32.totalorder %s17, 1
          %s246 = scalar_select %p245, %s17, 1
          %s247 = smul.addr %s246, 8
          %s248 = scalar_lea.vmem %s0, %s247
        $region44: #{tpu_custom_call.1} parent=39 // pred_fallthru
          _
      $region40: #{tpu_custom_call.1} parent=5 // pred_fallthru
        _
      %p249 = scmp.le.s32.totalorder 1, %s17
      %p250 = scmp.lt.s32.totalorder %s17, 3
      %p251 = pnand %p249, %p250
      %p252 = pneg %p251
      // Predicated region
      $region45: #{tpu_custom_call.1} parent=5 // pred_check
        _
      $region46: #{tpu_custom_call.1} parent=5 // pred_check_branch
        %254 = sbr.rel (%p251) target = $region48
      $region47: #{tpu_custom_call.1} parent=5 // pred_region
        %s255 = ssub.s32 %s17, 1
        // Predicated region
        $region49: #{tpu_custom_call.1} parent=47 // pred_check
          %p256 = pneg %p64
        $region50: #{tpu_custom_call.1} parent=47 // pred_check_branch
          %258 = sbr.rel (%p256) target = $region52
        $region51: #{tpu_custom_call.1} parent=47 // pred_region
          %259 = dma.done [#allocation3], 256
        $region52: #{tpu_custom_call.1} parent=47 // pred_fallthru
          _
        %p260 = scmp.lt.s32.totalorder %s22, 1
        %s261 = scalar_select %p260, %s22, 1
        %s262 = smul.addr %s261, 8
        %s263 = scalar_lea.vmem %s0, %s262
        %p264 = pneg %p43
        %p265 = pneg %p40
        %p266 = pneg %p64
        %p267 = pneg %p61
        %p268 = pneg %p85
        %p269 = pneg %p82
        %p270 = pneg %p106
        %p271 = pneg %p103
        %p272 = pneg %p127
        %p273 = pneg %p124
        %p274 = pneg %p148
        %p275 = pneg %p145
        %p276 = pneg %p169
        %p277 = pneg %p166
        %p278 = pneg %p195
        %p279 = pneg %p192
        %s280 = sand.u32 %s182, 1
        %s281 = scalar_lea.sflag [#allocation4], %s280
        %s282 = sand.u32 %s182, 1
        %s283 = smul.addr %s282, 8
        %s284 = scalar_lea.vmem [#allocation5], %s283
        %p285 = scmp.lt.s32.totalorder %s22, 1
        %s286 = scalar_select %p285, %s22, 1
        %s287 = smul.addr %s286, 8
        %s288 = scalar_lea.vmem %s0, %s287
        %v290 = vld [vmem:[%s288] sm:$0xff]
        %v291 = vld [vmem:[#allocation2] sm:$0xf]
        %v292 = vld [vmem:[#allocation2 + $0x4] sm:$0xf]
        %v293 = vld [vmem:[#allocation2 + $0x8] sm:$0xf]
        %v294 = vld [vmem:[#allocation2 + $0xc] sm:$0xf]
        %v295 = vld [vmem:[%s2] sm:$0x1]
        %v296 = vpack.c.bf16 %v290, %v290
        %v298 = vlaneseq
        %v299 = vshrl.u32 %v298, 7
        %v300 = vsub.s32 0, %v299
        %v301 = vrot.slane %v295, %v300
        %v307 = vunpack.c.l.b16 %v291
        %v308 = vunpack.c.l.b16 %v292
        %v309 = vunpack.c.l.b16 %v293
        %v310 = vunpack.c.l.b16 %v294
        %v311 = vpack.c.b16 %v308, %v307
        %v312 = vpack.c.b16 %v310, %v309
        %vm315 = vcmask 261120
        %v317 = vsel %vm315, %v296, 0
        %319 = vmatprep.subr.bf16.mxu0 0
        %320 = vmatpush1.bf16.msra.mxu0 %v311
        %321 = vmatprep.subr.bf16.mxu0 0
        %322 = vmatpush1.bf16.msra.mxu0 %v312
        %323 = vmatprep.subr.bf16.mxu0 0
        %324 = vmatpush1.bf16.msra.mxu0 0
        %325 = vmatprep.subr.bf16.mxu0 0
        %326 = vmatpush1.bf16.msra.mxu0 0
        %327 = vmatprep.subr.bf16.mxu0 0
        %328 = vmatpush1.bf16.msra.mxu0 0
        %329 = vmatprep.subr.bf16.mxu0 0
        %330 = vmatpush1.bf16.msra.mxu0 0
        %331 = vmatprep.subr.bf16.mxu0 0
        %332 = vmatpush1.bf16.msra.mxu0 0
        %333 = vmatprep.subr.bf16.mxu0 0
        %334 = vmatpush1.bf16.msra.mxu0 0
        %335 = vmatprep.subr.bf16.mxu0 0
        %336 = vmatpush1.bf16.msra.mxu0 0
        %337 = vmatprep.subr.bf16.mxu0 0
        %338 = vmatpush1.bf16.msra.mxu0 0
        %339 = vmatprep.subr.bf16.mxu0 0
        %340 = vmatpush1.bf16.msra.mxu0 0
        %341 = vmatprep.subr.bf16.mxu0 0
        %342 = vmatpush1.bf16.msra.mxu0 0
        %343 = vmatprep.subr.bf16.mxu0 0
        %344 = vmatpush1.bf16.msra.mxu0 0
        %345 = vmatprep.subr.bf16.mxu0 0
        %346 = vmatpush1.bf16.msra.mxu0 0
        %347 = vmatprep.subr.bf16.mxu0 0
        %348 = vmatpush1.bf16.msra.mxu0 0
        %349 = vmatprep.subr.bf16.mxu0 0
        %350 = vmatpush1.bf16.msra.mxu0 0
        %351 = vmatprep.mubr.bf16.mxu0 0
        %352 = vmatmul.mubr.bf16.gmra.mrb[0].mxu0 %v317
        %v353 = vpop.f32.mrb[0].mxu0
        %v354 = vadd.f32 %v301, %v353
        %v355 = vpop.f32.mrb[0].mxu0
        %v356 = vpop.f32.mrb[0].mxu0
        %v357 = vpop.f32.mrb[0].mxu0
        %358 = vdwg.mxu0
        %v359 = vtanh.pop %v354
        %v360 = vld [vmem:[%s3] sm:$0xf]
        %v361 = vld [vmem:[%s3 + $0x4] sm:$0xf]
        %v362 = vld [vmem:[%s3 + $0x8] sm:$0xf]
        %v363 = vld [vmem:[%s3 + $0xc] sm:$0xf]
        %v364 = vld [vmem:[%s4] sm:$0x1]
        %v365 = vpack.c.bf16 %v359, %v359
        %v367 = vlaneseq
        %v368 = vshrl.u32 %v367, 7
        %v369 = vsub.s32 0, %v368
        %v370 = vrot.slane %v364, %v369
        %v376 = vunpack.c.l.b16 %v360
        %v377 = vunpack.c.l.b16 %v361
        %v378 = vunpack.c.l.b16 %v362
        %v379 = vunpack.c.l.b16 %v363
        %v380 = vpack.c.b16 %v377, %v376
        %v381 = vpack.c.b16 %v379, %v378
        %v385 = vsel %vm315, %v365, 0
        %387 = vmatprep.subr.bf16.mxu0 0
        %388 = vmatpush1.bf16.msra.mxu0 %v380
        %389 = vmatprep.subr.bf16.mxu0 0
        %390 = vmatpush1.bf16.msra.mxu0 %v381
        %391 = vmatprep.subr.bf16.mxu0 0
        %392 = vmatpush1.bf16.msra.mxu0 0
        %393 = vmatprep.subr.bf16.mxu0 0
        %394 = vmatpush1.bf16.msra.mxu0 0
        %395 = vmatprep.subr.bf16.mxu0 0
        %396 = vmatpush1.bf16.msra.mxu0 0
        %397 = vmatprep.subr.bf16.mxu0 0
        %398 = vmatpush1.bf16.msra.mxu0 0
        %399 = vmatprep.subr.bf16.mxu0 0
        %400 = vmatpush1.bf16.msra.mxu0 0
        %401 = vmatprep.subr.bf16.mxu0 0
        %402 = vmatpush1.bf16.msra.mxu0 0
        %403 = vmatprep.subr.bf16.mxu0 0
        %404 = vmatpush1.bf16.msra.mxu0 0
        %405 = vmatprep.subr.bf16.mxu0 0
        %406 = vmatpush1.bf16.msra.mxu0 0
        %407 = vmatprep.subr.bf16.mxu0 0
        %408 = vmatpush1.bf16.msra.mxu0 0
        %409 = vmatprep.subr.bf16.mxu0 0
        %410 = vmatpush1.bf16.msra.mxu0 0
        %411 = vmatprep.subr.bf16.mxu0 0
        %412 = vmatpush1.bf16.msra.mxu0 0
        %413 = vmatprep.subr.bf16.mxu0 0
        %414 = vmatpush1.bf16.msra.mxu0 0
        %415 = vmatprep.subr.bf16.mxu0 0
        %416 = vmatpush1.bf16.msra.mxu0 0
        %417 = vmatprep.subr.bf16.mxu0 0
        %418 = vmatpush1.bf16.msra.mxu0 0
        %419 = vmatprep.mubr.bf16.mxu0 0
        %420 = vmatmul.mubr.bf16.gmra.mrb[0].mxu0 %v385
        %v421 = vpop.f32.mrb[0].mxu0
        %v422 = vadd.f32 %v370, %v421
        %v423 = vpop.f32.mrb[0].mxu0
        %v424 = vpop.f32.mrb[0].mxu0
        %v425 = vpop.f32.mrb[0].mxu0
        %426 = vdwg.mxu0
        %v427 = vtanh.pop %v422
        %v428 = vld [vmem:[%s5] sm:$0xf]
        %v429 = vld [vmem:[%s5 + $0x4] sm:$0xf]
        %v430 = vld [vmem:[%s5 + $0x8] sm:$0xf]
        %v431 = vld [vmem:[%s5 + $0xc] sm:$0xf]
        %v432 = vld [vmem:[%s6] sm:$0x1]
        %v433 = vpack.c.bf16 %v427, %v427
        %v435 = vlaneseq
        %v436 = vshrl.u32 %v435, 7
        %v437 = vsub.s32 0, %v436
        %v438 = vrot.slane %v432, %v437
        %v444 = vunpack.c.l.b16 %v428
        %v445 = vunpack.c.l.b16 %v429
        %v446 = vunpack.c.l.b16 %v430
        %v447 = vunpack.c.l.b16 %v431
        %v448 = vpack.c.b16 %v445, %v444
        %v449 = vpack.c.b16 %v447, %v446
        %v453 = vsel %vm315, %v433, 0
        %455 = vmatprep.subr.bf16.mxu0 0
        %456 = vmatpush1.bf16.msra.mxu0 %v448
        %457 = vmatprep.subr.bf16.mxu0 0
        %458 = vmatpush1.bf16.msra.mxu0 %v449
        %459 = vmatprep.subr.bf16.mxu0 0
        %460 = vmatpush1.bf16.msra.mxu0 0
        %461 = vmatprep.subr.bf16.mxu0 0
        %462 = vmatpush1.bf16.msra.mxu0 0
        %463 = vmatprep.subr.bf16.mxu0 0
        %464 = vmatpush1.bf16.msra.mxu0 0
        %465 = vmatprep.subr.bf16.mxu0 0
        %466 = vmatpush1.bf16.msra.mxu0 0
        %467 = vmatprep.subr.bf16.mxu0 0
        %468 = vmatpush1.bf16.msra.mxu0 0
        %469 = vmatprep.subr.bf16.mxu0 0
        %470 = vmatpush1.bf16.msra.mxu0 0
        %471 = vmatprep.subr.bf16.mxu0 0
        %472 = vmatpush1.bf16.msra.mxu0 0
        %473 = vmatprep.subr.bf16.mxu0 0
        %474 = vmatpush1.bf16.msra.mxu0 0
        %475 = vmatprep.subr.bf16.mxu0 0
        %476 = vmatpush1.bf16.msra.mxu0 0
        %477 = vmatprep.subr.bf16.mxu0 0
        %478 = vmatpush1.bf16.msra.mxu0 0
        %479 = vmatprep.subr.bf16.mxu0 0
        %480 = vmatpush1.bf16.msra.mxu0 0
        %481 = vmatprep.subr.bf16.mxu0 0
        %482 = vmatpush1.bf16.msra.mxu0 0
        %483 = vmatprep.subr.bf16.mxu0 0
        %484 = vmatpush1.bf16.msra.mxu0 0
        %485 = vmatprep.subr.bf16.mxu0 0
        %486 = vmatpush1.bf16.msra.mxu0 0
        %487 = vmatprep.mubr.bf16.mxu0 0
        %488 = vmatmul.mubr.bf16.gmra.mrb[0].mxu0 %v453
        %v489 = vpop.f32.mrb[0].mxu0
        %v490 = vadd.f32 %v438, %v489
        %v491 = vpop.f32.mrb[0].mxu0
        %v492 = vpop.f32.mrb[0].mxu0
        %v493 = vpop.f32.mrb[0].mxu0
        %494 = vdwg.mxu0
        %vm495 = vcmask 195584
        %496 = vst.msk [vmem:[%s284] sm:$0xff] %vm495, %v490
        %s497 = sand.u32 %s182, 1
        %s498 = scalar_lea.sflag [#allocation4], %s497
        %s499 = sand.u32 %s182, 1
        %s500 = smul.addr %s499, 8
        %s501 = scalar_lea.vmem [#allocation5], %s500
        // Predicated region
        $region53: #{tpu_custom_call.1} parent=47 // pred_check
          %p502 = pneg %p192
        $region54: #{tpu_custom_call.1} parent=47 // pred_check_branch
          %504 = sbr.rel (%p502) target = $region56
        $region55: #{tpu_custom_call.1} parent=47 // pred_region
          %s506 = ssub.s32 128, 128
          %507 = vsyncadd %s498, %s506
          %s508 = smul.addr %s22, 128
          %s509 = scalar_lea.hbm %s7, %s508
          %s511 = sshll.u32 %s501, 4
          %s512 = int_to_ptr.vmem [resolvable:$true] %s511
          %514 = dma.vmem_to_hbm [thread:$0]  %s512, 128, %s509, %s498
        $region56: #{tpu_custom_call.1} parent=47 // pred_fallthru
          _
      $region48: #{tpu_custom_call.1} parent=5 // pred_fallthru
        _
      %p515 = scmp.le.s32.totalorder 2, %s17
      // Predicated region
      $region57: #{tpu_custom_call.1} parent=5 // pred_check
        %p516 = pneg %p515
      $region58: #{tpu_custom_call.1} parent=5 // pred_check_branch
        %518 = sbr.rel (%p516) target = $region60
      $region59: #{tpu_custom_call.1} parent=5 // pred_region
        %s519 = ssub.s32 %s17, 2
        // Predicated region
        $region61: #{tpu_custom_call.1} parent=59 // pred_check
          %p520 = pneg %p198
        $region62: #{tpu_custom_call.1} parent=59 // pred_check_branch
          %522 = sbr.rel (%p520) target = $region64
        $region63: #{tpu_custom_call.1} parent=59 // pred_region
          %s523 = sand.u32 %s183, 1
          %s524 = scalar_lea.sflag [#allocation4], %s523
          %s525 = sand.u32 %s183, 1
          %s526 = smul.addr %s525, 8
          %s527 = scalar_lea.vmem [#allocation5], %s526
          %528 = dma.done %s524, 128
        $region64: #{tpu_custom_call.1} parent=59 // pred_fallthru
          _
      $region60: #{tpu_custom_call.1} parent=5 // pred_fallthru
        _
    $region6: #{tpu_custom_call.1} parent=1 // loop_footer
      %s21 = sadd.s32 1, %s17
    $region7: #{tpu_custom_call.1} parent=1 // loop_footer_branch
      %16 = sbr.rel target = $region3
    $region8: #{tpu_custom_call.1} parent=1 // loop_exit
      _
    %529 = vsyncpa [#allocation3], 1
    %s530 = scalar_lea.sflag [#allocation3], 1
    %531 = vsyncpa %s530, 1
    %532 = vsyncpa [#allocation4], 1
    %s533 = scalar_lea.sflag [#allocation4], 1
    %534 = vsyncpa %s533, 1

</llo_original>
